<compile_context>
chip_gen: v6e
topology: v6e:2x2x1
jax: 0.10.0
libtpu: 0.0.40
codegen_flags: <defaults>
</compile_context>

<pallas_src>
import functools

import numpy as np
import jax
import jax.numpy as jnp
from jax import lax
from jax.experimental import pallas as pl
from jax.experimental.pallas import tpu as pltpu


# Odd 32-bit mixing constants (golden ratio, murmur3, lowbias32 finalizer).
_K1 = np.uint32(0x9E3779B9)
_K2 = np.uint32(0x85EBCA6B)
_M1 = np.uint32(0x7FEB352D)
_M2 = np.uint32(0x846CA68B)


def _mix32(h):
    """lowbias32 avalanche finalizer — decorrelates sequential counter inputs."""
    h = h ^ (h >> 16)
    h = h * _M1
    h = h ^ (h >> 15)
    h = h * _M2
    h = h ^ (h >> 16)
    return h


def _gaussian_noise_kernel(seed_ref, x_ref, o_ref, *, std):
    tile_rows, lane = x_ref.shape

    # Unique 32-bit counter per element of the *whole* array (block offset via
    # program_id), so every grid step / TensorCore draws an independent stream.
    row = lax.broadcasted_iota(jnp.int32, (tile_rows, lane), 0)
    col = lax.broadcasted_iota(jnp.int32, (tile_rows, lane), 1)
    gid = (pl.program_id(0) * tile_rows + row) * lane + col  # wraps past 2^31: fine for noise
    seed = seed_ref[0].astype(jnp.uint32) * _K2
    h = _mix32(gid.astype(jnp.uint32) * _K1 + seed)

    # Uniform in (0, 1): 24 high bits, shifted by half an ulp so log() never sees 0.
    # (Route through int32 before the float convert — universally supported.)
    u = ((h >> 8).astype(jnp.int32).astype(jnp.float32) + 0.5) * (1.0 / (1 << 24))

    # Standard-normal quantile (Abramowitz & Stegun 26.2.23, |err| < 4.5e-4).
    # Only one log + one sqrt per element land on the EUP; the rest is cheap VPU
    # polynomial work, keeping noise generation off the HBM stream.
    p = jnp.minimum(u, 1.0 - u)
    t = jnp.sqrt(-2.0 * jnp.log(p))
    num = 2.515517 + t * (0.802853 + t * 0.010328)
    den = 1.0 + t * (1.432788 + t * (0.189269 + t * 0.001308))
    mag = t - num / den
    z = jnp.where(u < 0.5, -mag, mag)

    # y = x + (std * x) * z  ==  x * (1 + std * z).  Cast the factor once to the
    # I/O dtype: f32 inputs are untouched, bf16 inputs multiply natively in bf16.
    factor = (1.0 + std * z).astype(o_ref.dtype)
    o_ref[...] = x_ref[...] * factor


def _slab(n, itemsize):
    """Choose (rows, lane, tile_rows) for a lane-dense 2D view of n elements.

    lane is the widest multiple of 128 (capped at 1024) dividing n so the reshape
    is copy-free.  Blocks target ~4 MiB (double-buffered in+out plus elementwise
    temporaries stays under the explicit 48 MiB VMEM limit, incl. v7x's 64 MiB
    physical), and tile_rows is shrunk so the grid has >= 2 steps when possible
    (both v7x TensorCores get work on the "parallel" axis).
    """
    lane = 128
    for cand in (1024, 512, 256):
        if n % cand == 0:
            lane = cand
            break
    rows = pl.cdiv(n, lane)
    if rows <= 8:
        # Tiny input: one full-extent block (exempt from the (8,128) rule).
        return rows, lane, rows
    target_rows = max(8, ((4 << 20) // (lane * itemsize)) // 8 * 8)   # ~4 MiB / block
    half_rows = max(8, (rows // 2) // 8 * 8)                          # >= 2 grid steps
    return rows, lane, min(target_rows, half_rows)


def gaussian_noise_pallas(x, seed, *, std=0.1, training=True,
                          is_relative_detach=True):
    """Forward pass of GaussianNoise."""
    # TODO(synk): is_relative_detach only changes gradient flow; the forward value
    # is identical, so it is a no-op in this forward-only kernel.
    del is_relative_detach
    if not training or std == 0.0:
        # PyTorch eval path: pure identity — no kernel, no extra HBM traffic.
        return x

    orig_shape, orig_dtype = x.shape, x.dtype
    n = x.size
    rows, lane, tile_rows = _slab(n, jnp.dtype(orig_dtype).itemsize)

    x_flat = x.reshape(-1)
    padded = rows * lane != n
    if padded:
        # Only when n is not a multiple of 128: the 2D reshape itself needs a pad.
        # Row-raggedness w.r.t. the tile is handled by Pallas partial blocks below,
        # with no host-side copy (perf-review item).
        x_flat = jnp.pad(x_flat, (0, rows * lane - n))
    x2d = x_flat.reshape(rows, lane)

    seed_arr = jnp.asarray([seed], dtype=jnp.int32)
    grid = (pl.cdiv(rows, tile_rows),)

    out2d = pl.pallas_call(
        functools.partial(_gaussian_noise_kernel, std=float(std)),
        out_shape=jax.ShapeDtypeStruct((rows, lane), orig_dtype),
        grid_spec=pltpu.PrefetchScalarGridSpec(
            num_scalar_prefetch=1,   # seed lands in SMEM, visible to kernel + index_maps
            grid=grid,
            in_specs=[pl.BlockSpec((tile_rows, lane), lambda i, seed: (i, 0))],
            out_specs=pl.BlockSpec((tile_rows, lane), lambda i, seed: (i, 0)),
        ),
        compiler_params=pltpu.CompilerParams(
            dimension_semantics=("parallel",),   # shards the stream across v7x's 2 TCs
            vmem_limit_bytes=48 << 20,           # room for 4 MiB blocks + temporaries
        ),
    )(seed_arr, x2d)

    out_flat = out2d.reshape(-1)
    if padded:
        out_flat = out_flat[:n]
    return out_flat.reshape(orig_shape)


if __name__ == "__main__":
    key = jax.random.PRNGKey(0)
    # NCHW input (PyTorch conv convention): batch=2, channels=4, spatial=16x16.
    x = jax.random.normal(key, (2, 4, 16, 16), dtype=jnp.float32)
    std = 0.1

    y = gaussian_noise_pallas(x, seed=1234, std=std, training=True)
    jax.block_until_ready(y)

    assert y.shape == x.shape, f"shape mismatch: {y.shape} vs {x.shape}"
    assert y.dtype == x.dtype, f"dtype mismatch: {y.dtype} vs {x.dtype}"
    assert bool(jnp.all(jnp.isfinite(y))), "non-finite output"
    assert bool(jnp.any(y != x)), "no noise was added in training mode"

    # Recover the per-element standard normal: y = x*(1 + std*z) => z = (y-x)/(std*x).
    mask = jnp.abs(x) > 1e-3
    safe_x = jnp.where(mask, x, 1.0)
    z = jnp.where(mask, (y - x) / (std * safe_x), 0.0)
    cnt = jnp.sum(mask)
    z_mean = float(jnp.sum(z) / cnt)
    z_var = float(jnp.sum(jnp.where(mask, (z - z_mean) ** 2, 0.0)) / cnt)
    z_std = z_var ** 0.5
    assert abs(z_mean) < 0.25, f"noise mean looks wrong: {z_mean}"
    assert 0.6 < z_std < 1.4, f"noise std looks wrong: {z_std}"

    # Eval mode must be a bitwise identity (no kernel launched).
    y_eval = gaussian_noise_pallas(x, seed=1234, std=std, training=False)
    assert bool(jnp.all(y_eval == x)), "eval-mode output must equal input"

    print("KERNEL_OK")
</pallas_src>

<mosaic_0001>
module attributes {stable_mosaic.version = 11 : i64} {
  func.func @_gaussian_noise_kernel(%arg0: i32, %arg1: memref<1xi32, #tpu.memory_space<smem>>, %arg2: memref<2x1024xf32, #tpu.memory_space<vmem>>, %arg3: memref<2x1024xf32, #tpu.memory_space<vmem>>) attributes {dimension_semantics = [#tpu.dimension_semantics<parallel>], iteration_bounds = array<i64: 1>, scalar_prefetch = 1 : i64, scratch_operands = 0 : i64, tpu.core_type = #tpu.core_type<tc>, window_params = [{transform_indices = @transform_0, window_bounds = array<i64: 2, 1024>}, {transform_indices = @transform_1, window_bounds = array<i64: 2, 1024>}]} {
    %0 = tpu.iota {dimensions = array<i32: 0>} : vector<2x1024xi32>
    %1 = tpu.iota {dimensions = array<i32: 1>} : vector<2x1024xi32>
    %c2_i32 = arith.constant 2 : i32
    %2 = arith.muli %arg0, %c2_i32 : i32
    %3 = vector.broadcast %2 : i32 to vector<2x1024xi32>
    %4 = arith.addi %3, %0 : vector<2x1024xi32>
    %c1024_i32 = arith.constant 1024 : i32
    %5 = vector.broadcast %c1024_i32 : i32 to vector<2x1024xi32>
    %6 = arith.muli %4, %5 : vector<2x1024xi32>
    %7 = arith.addi %6, %1 : vector<2x1024xi32>
    %c0 = arith.constant 0 : index
    %8 = memref.load %arg1[%c0] : memref<1xi32, #tpu.memory_space<smem>>
    %c-2048144789_i32 = arith.constant -2048144789 : i32
    %9 = arith.muli %8, %c-2048144789_i32 : i32
    %c-1640531527_i32 = arith.constant -1640531527 : i32
    %10 = vector.broadcast %c-1640531527_i32 : i32 to vector<2x1024xi32>
    %11 = arith.muli %7, %10 : vector<2x1024xi32>
    %12 = vector.broadcast %9 : i32 to vector<2x1024xi32>
    %13 = arith.addi %11, %12 : vector<2x1024xi32>
    %c16_i32 = arith.constant 16 : i32
    %14 = vector.broadcast %c16_i32 : i32 to vector<2x1024xi32>
    %15 = arith.shrui %13, %14 : vector<2x1024xi32>
    %16 = arith.xori %13, %15 : vector<2x1024xi32>
    %c2146121005_i32 = arith.constant 2146121005 : i32
    %17 = vector.broadcast %c2146121005_i32 : i32 to vector<2x1024xi32>
    %18 = arith.muli %16, %17 : vector<2x1024xi32>
    %c15_i32 = arith.constant 15 : i32
    %19 = vector.broadcast %c15_i32 : i32 to vector<2x1024xi32>
    %20 = arith.shrui %18, %19 : vector<2x1024xi32>
    %21 = arith.xori %18, %20 : vector<2x1024xi32>
    %c-2073254261_i32 = arith.constant -2073254261 : i32
    %22 = vector.broadcast %c-2073254261_i32 : i32 to vector<2x1024xi32>
    %23 = arith.muli %21, %22 : vector<2x1024xi32>
    %c16_i32_0 = arith.constant 16 : i32
    %24 = vector.broadcast %c16_i32_0 : i32 to vector<2x1024xi32>
    %25 = arith.shrui %23, %24 : vector<2x1024xi32>
    %26 = arith.xori %23, %25 : vector<2x1024xi32>
    %c8_i32 = arith.constant 8 : i32
    %27 = vector.broadcast %c8_i32 : i32 to vector<2x1024xi32>
    %28 = arith.shrui %26, %27 : vector<2x1024xi32>
    %29 = arith.sitofp %28 : vector<2x1024xi32> to vector<2x1024xf32>
    %cst = arith.constant 5.000000e-01 : f32
    %30 = vector.broadcast %cst : f32 to vector<2x1024xf32>
    %31 = arith.addf %29, %30 : vector<2x1024xf32>
    %cst_1 = arith.constant 5.96046448E-8 : f32
    %32 = vector.broadcast %cst_1 : f32 to vector<2x1024xf32>
    %33 = arith.mulf %31, %32 : vector<2x1024xf32>
    %cst_2 = arith.constant 1.000000e+00 : f32
    %34 = vector.broadcast %cst_2 : f32 to vector<2x1024xf32>
    %35 = arith.subf %34, %33 : vector<2x1024xf32>
    %36 = arith.minimumf %33, %35 : vector<2x1024xf32>
    %37 = math.log %36 : vector<2x1024xf32>
    %cst_3 = arith.constant -2.000000e+00 : f32
    %38 = vector.broadcast %cst_3 : f32 to vector<2x1024xf32>
    %39 = arith.mulf %38, %37 : vector<2x1024xf32>
    %40 = math.sqrt %39 : vector<2x1024xf32>
    %cst_4 = arith.constant 1.032800e-02 : f32
    %41 = vector.broadcast %cst_4 : f32 to vector<2x1024xf32>
    %42 = arith.mulf %40, %41 : vector<2x1024xf32>
    %cst_5 = arith.constant 0.802852988 : f32
    %43 = vector.broadcast %cst_5 : f32 to vector<2x1024xf32>
    %44 = arith.addf %43, %42 : vector<2x1024xf32>
    %45 = arith.mulf %40, %44 : vector<2x1024xf32>
    %cst_6 = arith.constant 2.515517 : f32
    %46 = vector.broadcast %cst_6 : f32 to vector<2x1024xf32>
    %47 = arith.addf %46, %45 : vector<2x1024xf32>
    %cst_7 = arith.constant 1.308000e-03 : f32
    %48 = vector.broadcast %cst_7 : f32 to vector<2x1024xf32>
    %49 = arith.mulf %40, %48 : vector<2x1024xf32>
    %cst_8 = arith.constant 1.892690e-01 : f32
    %50 = vector.broadcast %cst_8 : f32 to vector<2x1024xf32>
    %51 = arith.addf %50, %49 : vector<2x1024xf32>
    %52 = arith.mulf %40, %51 : vector<2x1024xf32>
    %cst_9 = arith.constant 1.43278801 : f32
    %53 = vector.broadcast %cst_9 : f32 to vector<2x1024xf32>
    %54 = arith.addf %53, %52 : vector<2x1024xf32>
    %55 = arith.mulf %40, %54 : vector<2x1024xf32>
    %cst_10 = arith.constant 1.000000e+00 : f32
    %56 = vector.broadcast %cst_10 : f32 to vector<2x1024xf32>
    %57 = arith.addf %56, %55 : vector<2x1024xf32>
    %58 = arith.divf %47, %57 : vector<2x1024xf32>
    %59 = arith.subf %40, %58 : vector<2x1024xf32>
    %cst_11 = arith.constant 5.000000e-01 : f32
    %60 = vector.broadcast %cst_11 : f32 to vector<2x1024xf32>
    %61 = arith.cmpf olt, %33, %60 : vector<2x1024xf32>
    %cst_12 = arith.constant 0.000000e+00 : f32
    %62 = vector.broadcast %cst_12 : f32 to vector<2x1024xf32>
    %63 = arith.subf %62, %59 : vector<2x1024xf32>
    %64 = arith.select %61, %63, %59 : vector<2x1024xi1>, vector<2x1024xf32>
    %cst_13 = arith.constant 1.000000e-01 : f32
    %65 = vector.broadcast %cst_13 : f32 to vector<2x1024xf32>
    %66 = arith.mulf %65, %64 : vector<2x1024xf32>
    %cst_14 = arith.constant 1.000000e+00 : f32
    %67 = vector.broadcast %cst_14 : f32 to vector<2x1024xf32>
    %68 = arith.addf %67, %66 : vector<2x1024xf32>
    %c0_15 = arith.constant 0 : index
    %c0_16 = arith.constant 0 : index
    %69 = vector.load %arg2[%c0_15, %c0_16] : memref<2x1024xf32, #tpu.memory_space<vmem>>, vector<2x1024xf32>
    %70 = arith.mulf %69, %68 : vector<2x1024xf32>
    %c0_17 = arith.constant 0 : index
    %c0_18 = arith.constant 0 : index
    %71 = vector.load %arg3[%c0_17, %c0_18] : memref<2x1024xf32, #tpu.memory_space<vmem>>, vector<2x1024xf32>
    tpu.vector_store %arg3[%c0_17, %c0_18], %70 {strides = array<i32>} : memref<2x1024xf32, #tpu.memory_space<vmem>>, vector<2x1024xf32>,
    return
  }
  func.func @transform_0(%arg0: i32, %arg1: memref<1xi32, #tpu.memory_space<smem>>) -> (i32, i32) {
    %c0_i32 = arith.constant 0 : i32
    %c0_i32_0 = arith.constant 0 : i32
    return %arg0, %c0_i32 : i32, i32
  }
  func.func @transform_1(%arg0: i32, %arg1: memref<1xi32, #tpu.memory_space<smem>>) -> (i32, i32) {
    %c0_i32 = arith.constant 0 : i32
    %c0_i32_0 = arith.constant 0 : i32
    return %arg0, %c0_i32 : i32, i32
  }
}

</mosaic_0001>

<llo_original>
// kernel: tpu_custom_call.1
$region0: #{tpu_custom_call.1}
  #allocation0 [shape = 'u32[]', space=smem, size = 0x4, offset = 0x4, fixed_abs, tag = 'smem constant byte address 0x4 - core index']
  #allocation1 [shape = 'u32[144,128]{1,0:T(1,128)}', space=vmem, size = 0x12000, scoped, tag = 'internal scratch']
  #allocation2 [shape = 's32[1]{0}', space=sflag, size = 0x4, scoped, tag = 'scoped memory for tpu_custom_call.1']
  #allocation3 [shape = 's32[1]{0:T(128)S(6)}', space=smem, size = 0x200, scoped, tag = 'prefetched SMEM operand 0']
  %s0 = inlined_call_operand.<no memory space> [shape: s32[1], index: 0, kind: input, shape index: {}]
  %s1 = inlined_call_operand.hbm [shape: f32[2,1024], index: 1, kind: input, shape index: {}]
  %s2 = inlined_call_operand.hbm [shape: f32[2,1024], index: 2, kind: output, shape index: {}]
  %s3 = sld [smem:[#allocation0]]
  $region18: #{tpu_custom_call.1} parent=0
    _
  %s5 = ssub.s32 1, %s3
  %s6 = scalar_select 0, %s5, %s3
  %7 = sst [smem:[#allocation3]] %s0
  $region1: #{tpu_custom_call.1} parent=0
    #allocation4 [shape = 'u8[8192]{0}', space=vmem, size = 0x2000, scoped, tag = 'input window, operand 1, single buffered']
    #allocation5 [shape = 's32[1]{0}', space=sflag, size = 0x4, scoped, tag = 'scoped memory for tpu_custom_call.1']
    #allocation6 [shape = 's32[1]{0}', space=sflag, size = 0x4, scoped, tag = 'scoped memory for tpu_custom_call.1']
    #allocation7 [shape = 'u8[8192]{0}', space=vmem, size = 0x2000, scoped, tag = 'output window, operand 0, single buffered']
    %8 = vsyncpa [#allocation5], 0
    %9 = vsyncpa [#allocation6], 0
    // Predicated region
    $region2: #{tpu_custom_call.1} parent=1 // pred_check
      _
    $region3: #{tpu_custom_call.1} parent=1 // pred_check_branch
      %11 = sbr.rel (0) target = $region5
    $region4: #{tpu_custom_call.1} parent=1 // pred_region
      %s13 = ssub.s32 256, 256
      %14 = vsyncadd [#allocation5], %s13
      %s16 = sshll.u32 [#allocation4], 4
      %s17 = int_to_ptr.vmem [resolvable:$true] %s16
      %19 = dma.hbm_to_vmem [thread:$0]  %s1, 256, %s17, [#allocation5]
    $region5: #{tpu_custom_call.1} parent=1 // pred_fallthru
      _
    // Predicated region
    $region6: #{tpu_custom_call.1} parent=1 // pred_check
      _
    $region7: #{tpu_custom_call.1} parent=1 // pred_check_branch
      %21 = sbr.rel (0) target = $region9
    $region8: #{tpu_custom_call.1} parent=1 // pred_region
      %22 = dma.done [#allocation5], 256
    $region9: #{tpu_custom_call.1} parent=1 // pred_fallthru
      _
    %v23 = vlaneseq
    %v24 = vshrl.u32 %v23, 7
    %v25 = vlaneseq
    %v26 = vand.u32 %v25, 127
    %v27 = vadd.s32 %v26, 128
    %v28 = vadd.s32 %v26, 256
    %v29 = vadd.s32 %v26, 384
    %v30 = vadd.s32 %v26, 512
    %v31 = vadd.s32 %v26, 640
    %v32 = vadd.s32 %v26, 768
    %v33 = vadd.s32 %v26, 896
    %s34 = smul.u32 0, 2
    %v35 = vstv %s34
    %v36 = vadd.s32 %v35, %v24
    %v37 = vmul.u32 %v36, 1024
    %v38 = vadd.s32 %v37, %v26
    %v39 = vadd.s32 %v37, %v27
    %v40 = vadd.s32 %v37, %v28
    %v41 = vadd.s32 %v37, %v29
    %v42 = vadd.s32 %v37, %v30
    %v43 = vadd.s32 %v37, %v31
    %v44 = vadd.s32 %v37, %v32
    %v45 = vadd.s32 %v37, %v33
    %s46 = sld [smem:[#allocation3]]
    %s47 = smul.u32 %s46, 2246822507
    %v48 = vmul.u32 %v38, 2654435769
    %v49 = vmul.u32 %v39, 2654435769
    %v50 = vmul.u32 %v40, 2654435769
    %v51 = vmul.u32 %v41, 2654435769
    %v52 = vmul.u32 %v42, 2654435769
    %v53 = vmul.u32 %v43, 2654435769
    %v54 = vmul.u32 %v44, 2654435769
    %v55 = vmul.u32 %v45, 2654435769
    %v56 = vstv %s47
    %v57 = vadd.s32 %v48, %v56
    %v58 = vadd.s32 %v49, %v56
    %v59 = vadd.s32 %v50, %v56
    %v60 = vadd.s32 %v51, %v56
    %v61 = vadd.s32 %v52, %v56
    %v62 = vadd.s32 %v53, %v56
    %v63 = vadd.s32 %v54, %v56
    %v64 = vadd.s32 %v55, %v56
    %v65 = vshrl.u32 %v57, 16
    %v66 = vshrl.u32 %v58, 16
    %v67 = vshrl.u32 %v59, 16
    %v68 = vshrl.u32 %v60, 16
    %v69 = vshrl.u32 %v61, 16
    %v70 = vshrl.u32 %v62, 16
    %v71 = vshrl.u32 %v63, 16
    %v72 = vshrl.u32 %v64, 16
    %v73 = vxor.u32 %v57, %v65
    %v74 = vxor.u32 %v58, %v66
    %v75 = vxor.u32 %v59, %v67
    %v76 = vxor.u32 %v60, %v68
    %v77 = vxor.u32 %v61, %v69
    %v78 = vxor.u32 %v62, %v70
    %v79 = vxor.u32 %v63, %v71
    %v80 = vxor.u32 %v64, %v72
    %v81 = vmul.u32 %v73, 2146121005
    %v82 = vmul.u32 %v74, 2146121005
    %v83 = vmul.u32 %v75, 2146121005
    %v84 = vmul.u32 %v76, 2146121005
    %v85 = vmul.u32 %v77, 2146121005
    %v86 = vmul.u32 %v78, 2146121005
    %v87 = vmul.u32 %v79, 2146121005
    %v88 = vmul.u32 %v80, 2146121005
    %v89 = vshrl.u32 %v81, 15
    %v90 = vshrl.u32 %v82, 15
    %v91 = vshrl.u32 %v83, 15
    %v92 = vshrl.u32 %v84, 15
    %v93 = vshrl.u32 %v85, 15
    %v94 = vshrl.u32 %v86, 15
    %v95 = vshrl.u32 %v87, 15
    %v96 = vshrl.u32 %v88, 15
    %v97 = vxor.u32 %v81, %v89
    %v98 = vxor.u32 %v82, %v90
    %v99 = vxor.u32 %v83, %v91
    %v100 = vxor.u32 %v84, %v92
    %v101 = vxor.u32 %v85, %v93
    %v102 = vxor.u32 %v86, %v94
    %v103 = vxor.u32 %v87, %v95
    %v104 = vxor.u32 %v88, %v96
    %v105 = vmul.u32 %v97, 2221713035
    %v106 = vmul.u32 %v98, 2221713035
    %v107 = vmul.u32 %v99, 2221713035
    %v108 = vmul.u32 %v100, 2221713035
    %v109 = vmul.u32 %v101, 2221713035
    %v110 = vmul.u32 %v102, 2221713035
    %v111 = vmul.u32 %v103, 2221713035
    %v112 = vmul.u32 %v104, 2221713035
    %v113 = vshrl.u32 %v105, 16
    %v114 = vshrl.u32 %v106, 16
    %v115 = vshrl.u32 %v107, 16
    %v116 = vshrl.u32 %v108, 16
    %v117 = vshrl.u32 %v109, 16
    %v118 = vshrl.u32 %v110, 16
    %v119 = vshrl.u32 %v111, 16
    %v120 = vshrl.u32 %v112, 16
    %v121 = vxor.u32 %v105, %v113
    %v122 = vxor.u32 %v106, %v114
    %v123 = vxor.u32 %v107, %v115
    %v124 = vxor.u32 %v108, %v116
    %v125 = vxor.u32 %v109, %v117
    %v126 = vxor.u32 %v110, %v118
    %v127 = vxor.u32 %v111, %v119
    %v128 = vxor.u32 %v112, %v120
    %v129 = vshrl.u32 %v121, 8
    %v130 = vshrl.u32 %v122, 8
    %v131 = vshrl.u32 %v123, 8
    %v132 = vshrl.u32 %v124, 8
    %v133 = vshrl.u32 %v125, 8
    %v134 = vshrl.u32 %v126, 8
    %v135 = vshrl.u32 %v127, 8
    %v136 = vshrl.u32 %v128, 8
    %v137 = vcvt.s32.f32 %v129
    %v138 = vcvt.s32.f32 %v130
    %v139 = vcvt.s32.f32 %v131
    %v140 = vcvt.s32.f32 %v132
    %v141 = vcvt.s32.f32 %v133
    %v142 = vcvt.s32.f32 %v134
    %v143 = vcvt.s32.f32 %v135
    %v144 = vcvt.s32.f32 %v136
    %v145 = vadd.f32 %v137, 0.5
    %v146 = vadd.f32 %v138, 0.5
    %v147 = vadd.f32 %v139, 0.5
    %v148 = vadd.f32 %v140, 0.5
    %v149 = vadd.f32 %v141, 0.5
    %v150 = vadd.f32 %v142, 0.5
    %v151 = vadd.f32 %v143, 0.5
    %v152 = vadd.f32 %v144, 0.5
    %v153 = vmul.f32 %v145, 5.9604645e-08
    %v154 = vmul.f32 %v146, 5.9604645e-08
    %v155 = vmul.f32 %v147, 5.9604645e-08
    %v156 = vmul.f32 %v148, 5.9604645e-08
    %v157 = vmul.f32 %v149, 5.9604645e-08
    %v158 = vmul.f32 %v150, 5.9604645e-08
    %v159 = vmul.f32 %v151, 5.9604645e-08
    %v160 = vmul.f32 %v152, 5.9604645e-08
    %v161 = vsub.f32 1.0, %v153
    %v162 = vsub.f32 1.0, %v154
    %v163 = vsub.f32 1.0, %v155
    %v164 = vsub.f32 1.0, %v156
    %v165 = vsub.f32 1.0, %v157
    %v166 = vsub.f32 1.0, %v158
    %v167 = vsub.f32 1.0, %v159
    %v168 = vsub.f32 1.0, %v160
    %v169 = vmin.f32 %v153, %v161
    %v170 = vmin.f32 %v154, %v162
    %v171 = vmin.f32 %v155, %v163
    %v172 = vmin.f32 %v156, %v164
    %v173 = vmin.f32 %v157, %v165
    %v174 = vmin.f32 %v158, %v166
    %v175 = vmin.f32 %v159, %v167
    %v176 = vmin.f32 %v160, %v168
    %v177 = vlog2.pop %v169
    %v178 = vmul.f32 %v177, 0.6931472
    %v179 = vlog2.pop %v170
    %v180 = vmul.f32 %v179, 0.6931472
    %v181 = vlog2.pop %v171
    %v182 = vmul.f32 %v181, 0.6931472
    %v183 = vlog2.pop %v172
    %v184 = vmul.f32 %v183, 0.6931472
    %v185 = vlog2.pop %v173
    %v186 = vmul.f32 %v185, 0.6931472
    %v187 = vlog2.pop %v174
    %v188 = vmul.f32 %v187, 0.6931472
    %v189 = vlog2.pop %v175
    %v190 = vmul.f32 %v189, 0.6931472
    %v191 = vlog2.pop %v176
    %v192 = vmul.f32 %v191, 0.6931472
    %v193 = vmul.f32 %v178, -2.0
    %v194 = vmul.f32 %v180, -2.0
    %v195 = vmul.f32 %v182, -2.0
    %v196 = vmul.f32 %v184, -2.0
    %v197 = vmul.f32 %v186, -2.0
    %v198 = vmul.f32 %v188, -2.0
    %v199 = vmul.f32 %v190, -2.0
    %v200 = vmul.f32 %v192, -2.0
    %v201 = vrsqrt.pop %v193
    %v202 = vmul.f32 %v193, %v201
    %vm203 = vcmp.eq.f32.partialorder %v193, inf
    %v204 = vsel %vm203, %v193, %v202
    %vm205 = vcmp.eq.f32.partialorder %v193, 0.0
    %v206 = vand.u32 %v193, 2147483648
    %v207 = vsel %vm205, %v206, %v204
    %v208 = vrsqrt.pop %v194
    %v209 = vmul.f32 %v194, %v208
    %vm210 = vcmp.eq.f32.partialorder %v194, inf
    %v211 = vsel %vm210, %v194, %v209
    %vm212 = vcmp.eq.f32.partialorder %v194, 0.0
    %v213 = vand.u32 %v194, 2147483648
    %v214 = vsel %vm212, %v213, %v211
    %v215 = vrsqrt.pop %v195
    %v216 = vmul.f32 %v195, %v215
    %vm217 = vcmp.eq.f32.partialorder %v195, inf
    %v218 = vsel %vm217, %v195, %v216
    %vm219 = vcmp.eq.f32.partialorder %v195, 0.0
    %v220 = vand.u32 %v195, 2147483648
    %v221 = vsel %vm219, %v220, %v218
    %v222 = vrsqrt.pop %v196
    %v223 = vmul.f32 %v196, %v222
    %vm224 = vcmp.eq.f32.partialorder %v196, inf
    %v225 = vsel %vm224, %v196, %v223
    %vm226 = vcmp.eq.f32.partialorder %v196, 0.0
    %v227 = vand.u32 %v196, 2147483648
    %v228 = vsel %vm226, %v227, %v225
    %v229 = vrsqrt.pop %v197
    %v230 = vmul.f32 %v197, %v229
    %vm231 = vcmp.eq.f32.partialorder %v197, inf
    %v232 = vsel %vm231, %v197, %v230
    %vm233 = vcmp.eq.f32.partialorder %v197, 0.0
    %v234 = vand.u32 %v197, 2147483648
    %v235 = vsel %vm233, %v234, %v232
    %v236 = vrsqrt.pop %v198
    %v237 = vmul.f32 %v198, %v236
    %vm238 = vcmp.eq.f32.partialorder %v198, inf
    %v239 = vsel %vm238, %v198, %v237
    %vm240 = vcmp.eq.f32.partialorder %v198, 0.0
    %v241 = vand.u32 %v198, 2147483648
    %v242 = vsel %vm240, %v241, %v239
    %v243 = vrsqrt.pop %v199
    %v244 = vmul.f32 %v199, %v243
    %vm245 = vcmp.eq.f32.partialorder %v199, inf
    %v246 = vsel %vm245, %v199, %v244
    %vm247 = vcmp.eq.f32.partialorder %v199, 0.0
    %v248 = vand.u32 %v199, 2147483648
    %v249 = vsel %vm247, %v248, %v246
    %v250 = vrsqrt.pop %v200
    %v251 = vmul.f32 %v200, %v250
    %vm252 = vcmp.eq.f32.partialorder %v200, inf
    %v253 = vsel %vm252, %v200, %v251
    %vm254 = vcmp.eq.f32.partialorder %v200, 0.0
    %v255 = vand.u32 %v200, 2147483648
    %v256 = vsel %vm254, %v255, %v253
    %v257 = vmul.f32 %v207, 0.010328
    %v258 = vmul.f32 %v214, 0.010328
    %v259 = vmul.f32 %v221, 0.010328
    %v260 = vmul.f32 %v228, 0.010328
    %v261 = vmul.f32 %v235, 0.010328
    %v262 = vmul.f32 %v242, 0.010328
    %v263 = vmul.f32 %v249, 0.010328
    %v264 = vmul.f32 %v256, 0.010328
    %v265 = vadd.f32 %v257, 0.802853
    %v266 = vadd.f32 %v258, 0.802853
    %v267 = vadd.f32 %v259, 0.802853
    %v268 = vadd.f32 %v260, 0.802853
    %v269 = vadd.f32 %v261, 0.802853
    %v270 = vadd.f32 %v262, 0.802853
    %v271 = vadd.f32 %v263, 0.802853
    %v272 = vadd.f32 %v264, 0.802853
    %v273 = vmul.f32 %v207, %v265
    %v274 = vmul.f32 %v214, %v266
    %v275 = vmul.f32 %v221, %v267
    %v276 = vmul.f32 %v228, %v268
    %v277 = vmul.f32 %v235, %v269
    %v278 = vmul.f32 %v242, %v270
    %v279 = vmul.f32 %v249, %v271
    %v280 = vmul.f32 %v256, %v272
    %v281 = vadd.f32 %v273, 2.515517
    %v282 = vadd.f32 %v274, 2.515517
    %v283 = vadd.f32 %v275, 2.515517
    %v284 = vadd.f32 %v276, 2.515517
    %v285 = vadd.f32 %v277, 2.515517
    %v286 = vadd.f32 %v278, 2.515517
    %v287 = vadd.f32 %v279, 2.515517
    %v288 = vadd.f32 %v280, 2.515517
    %v289 = vmul.f32 %v207, 0.001308
    %v290 = vmul.f32 %v214, 0.001308
    %v291 = vmul.f32 %v221, 0.001308
    %v292 = vmul.f32 %v228, 0.001308
    %v293 = vmul.f32 %v235, 0.001308
    %v294 = vmul.f32 %v242, 0.001308
    %v295 = vmul.f32 %v249, 0.001308
    %v296 = vmul.f32 %v256, 0.001308
    %v297 = vadd.f32 %v289, 0.189269
    %v298 = vadd.f32 %v290, 0.189269
    %v299 = vadd.f32 %v291, 0.189269
    %v300 = vadd.f32 %v292, 0.189269
    %v301 = vadd.f32 %v293, 0.189269
    %v302 = vadd.f32 %v294, 0.189269
    %v303 = vadd.f32 %v295, 0.189269
    %v304 = vadd.f32 %v296, 0.189269
    %v305 = vmul.f32 %v207, %v297
    %v306 = vmul.f32 %v214, %v298
    %v307 = vmul.f32 %v221, %v299
    %v308 = vmul.f32 %v228, %v300
    %v309 = vmul.f32 %v235, %v301
    %v310 = vmul.f32 %v242, %v302
    %v311 = vmul.f32 %v249, %v303
    %v312 = vmul.f32 %v256, %v304
    %v313 = vadd.f32 %v305, 1.432788
    %v314 = vadd.f32 %v306, 1.432788
    %v315 = vadd.f32 %v307, 1.432788
    %v316 = vadd.f32 %v308, 1.432788
    %v317 = vadd.f32 %v309, 1.432788
    %v318 = vadd.f32 %v310, 1.432788
    %v319 = vadd.f32 %v311, 1.432788
    %v320 = vadd.f32 %v312, 1.432788
    %v321 = vmul.f32 %v207, %v313
    %v322 = vmul.f32 %v214, %v314
    %v323 = vmul.f32 %v221, %v315
    %v324 = vmul.f32 %v228, %v316
    %v325 = vmul.f32 %v235, %v317
    %v326 = vmul.f32 %v242, %v318
    %v327 = vmul.f32 %v249, %v319
    %v328 = vmul.f32 %v256, %v320
    %v329 = vadd.f32 %v321, 1.0
    %v330 = vadd.f32 %v322, 1.0
    %v331 = vadd.f32 %v323, 1.0
    %v332 = vadd.f32 %v324, 1.0
    %v333 = vadd.f32 %v325, 1.0
    %v334 = vadd.f32 %v326, 1.0
    %v335 = vadd.f32 %v327, 1.0
    %v336 = vadd.f32 %v328, 1.0
    %v337 = vrcp.pop %v329
    %v338 = vmul.f32 %v281, %v337
    %v339 = vrcp.pop %v330
    %v340 = vmul.f32 %v282, %v339
    %v341 = vrcp.pop %v331
    %v342 = vmul.f32 %v283, %v341
    %v343 = vrcp.pop %v332
    %v344 = vmul.f32 %v284, %v343
    %v345 = vrcp.pop %v333
    %v346 = vmul.f32 %v285, %v345
    %v347 = vrcp.pop %v334
    %v348 = vmul.f32 %v286, %v347
    %v349 = vrcp.pop %v335
    %v350 = vmul.f32 %v287, %v349
    %v351 = vrcp.pop %v336
    %v352 = vmul.f32 %v288, %v351
    %v353 = vsub.f32 %v207, %v338
    %v354 = vsub.f32 %v214, %v340
    %v355 = vsub.f32 %v221, %v342
    %v356 = vsub.f32 %v228, %v344
    %v357 = vsub.f32 %v235, %v346
    %v358 = vsub.f32 %v242, %v348
    %v359 = vsub.f32 %v249, %v350
    %v360 = vsub.f32 %v256, %v352
    %vm361 = vcmp.lt.f32.partialorder %v153, 0.5
    %vm362 = vcmp.lt.f32.partialorder %v154, 0.5
    %vm363 = vcmp.lt.f32.partialorder %v155, 0.5
    %vm364 = vcmp.lt.f32.partialorder %v156, 0.5
    %vm365 = vcmp.lt.f32.partialorder %v157, 0.5
    %vm366 = vcmp.lt.f32.partialorder %v158, 0.5
    %vm367 = vcmp.lt.f32.partialorder %v159, 0.5
    %vm368 = vcmp.lt.f32.partialorder %v160, 0.5
    %v369 = vsub.f32 0.0, %v353
    %v370 = vsub.f32 0.0, %v354
    %v371 = vsub.f32 0.0, %v355
    %v372 = vsub.f32 0.0, %v356
    %v373 = vsub.f32 0.0, %v357
    %v374 = vsub.f32 0.0, %v358
    %v375 = vsub.f32 0.0, %v359
    %v376 = vsub.f32 0.0, %v360
    %v377 = vsel %vm361, %v369, %v353
    %v378 = vsel %vm362, %v370, %v354
    %v379 = vsel %vm363, %v371, %v355
    %v380 = vsel %vm364, %v372, %v356
    %v381 = vsel %vm365, %v373, %v357
    %v382 = vsel %vm366, %v374, %v358
    %v383 = vsel %vm367, %v375, %v359
    %v384 = vsel %vm368, %v376, %v360
    %v385 = vmul.f32 %v377, 0.1
    %v386 = vmul.f32 %v378, 0.1
    %v387 = vmul.f32 %v379, 0.1
    %v388 = vmul.f32 %v380, 0.1
    %v389 = vmul.f32 %v381, 0.1
    %v390 = vmul.f32 %v382, 0.1
    %v391 = vmul.f32 %v383, 0.1
    %v392 = vmul.f32 %v384, 0.1
    %v393 = vadd.f32 %v385, 1.0
    %v394 = vadd.f32 %v386, 1.0
    %v395 = vadd.f32 %v387, 1.0
    %v396 = vadd.f32 %v388, 1.0
    %v397 = vadd.f32 %v389, 1.0
    %v398 = vadd.f32 %v390, 1.0
    %v399 = vadd.f32 %v391, 1.0
    %v400 = vadd.f32 %v392, 1.0
    %v401 = vld [vmem:[#allocation4] sm:$0xff]
    %v402 = vld [vmem:[#allocation4 + $0x8] sm:$0xff]
    %v411 = vcombine.low %v393, %v394
    %v412 = vcombine.low %v395, %v396
    %v414 = vunpack.c.l.s4 1983009808
    %v415 = vunpack.c.0.s8 %v414
    %v416 = vlaneseq
    %v417 = vshrl.u32 %v416, 7
    %v418 = vsub.s32 %v415, %v417
    %v419 = vrot.slane %v411, %v418
    %v421 = vunpack.c.l.s4 1983009808
    %v422 = vunpack.c.0.s8 %v421
    %v423 = vlaneseq
    %v424 = vshrl.u32 %v423, 7
    %v425 = vsub.s32 %v422, %v424
    %v426 = vrot.slane %v412, %v425
    %v427 = vcombine.low %v419, %v426
    %v428 = vcombine.low %v397, %v398
    %v429 = vcombine.low %v399, %v400
    %v431 = vunpack.c.l.s4 1983009808
    %v432 = vunpack.c.0.s8 %v431
    %v433 = vlaneseq
    %v434 = vshrl.u32 %v433, 7
    %v435 = vsub.s32 %v432, %v434
    %v436 = vrot.slane %v428, %v435
    %v438 = vunpack.c.l.s4 1983009808
    %v439 = vunpack.c.0.s8 %v438
    %v440 = vlaneseq
    %v441 = vshrl.u32 %v440, 7
    %v442 = vsub.s32 %v439, %v441
    %v443 = vrot.slane %v429, %v442
    %v444 = vcombine.low %v436, %v443
    %v447 = vmul.f32 %v401, %v427
    %v448 = vmul.f32 %v402, %v444
    %449 = vst [vmem:[#allocation7] sm:$0xff] %v447
    %450 = vst [vmem:[#allocation7 + $0x8] sm:$0xff] %v448
    // Predicated region
    $region10: #{tpu_custom_call.1} parent=1 // pred_check
      _
    $region11: #{tpu_custom_call.1} parent=1 // pred_check_branch
      %452 = sbr.rel (0) target = $region13
    $region12: #{tpu_custom_call.1} parent=1 // pred_region
      %s454 = ssub.s32 256, 256
      %455 = vsyncadd [#allocation6], %s454
      %s457 = sshll.u32 [#allocation7], 4
      %s458 = int_to_ptr.vmem [resolvable:$true] %s457
      %460 = dma.vmem_to_hbm [thread:$0]  %s458, 256, %s2, [#allocation6]
    $region13: #{tpu_custom_call.1} parent=1 // pred_fallthru
      _
    // Predicated region
    $region14: #{tpu_custom_call.1} parent=1 // pred_check
      _
    $region15: #{tpu_custom_call.1} parent=1 // pred_check_branch
      %462 = sbr.rel (0) target = $region17
    $region16: #{tpu_custom_call.1} parent=1 // pred_region
      %463 = dma.done [#allocation6], 256
    $region17: #{tpu_custom_call.1} parent=1 // pred_fallthru
      _
    %464 = vsyncpa [#allocation5], 1
    %465 = vsyncpa [#allocation6], 1

</llo_original>
